<compile_context>
chip_gen: v7x
topology: tpu7x:2x2x1
jax: 0.10.0
libtpu: 0.0.40
codegen_flags: <defaults>
</compile_context>

<pallas_src>
import jax
import jax.numpy as jnp
from jax.experimental import pallas as pl
from jax.experimental.pallas import tpu as pltpu

_LANE = 128  # lane width (last dim)


def _round_up(x, m):
    return (x + m - 1) // m * m


def _fc_kernel(x_ref, w_ref, b_ref, o_ref):
    # x_ref: (B, E) f32   w_ref: (E, Np) bf16   b_ref: (1, Np) f32   o_ref: (B, Np) f32
    x_bf16 = x_ref[...].astype(jnp.bfloat16)           # cheap VPU cast, stays in VMEM
    acc = jnp.dot(x_bf16, w_ref[...], preferred_element_type=jnp.float32)
    o_ref[...] = (acc + b_ref[...]).astype(o_ref.dtype)


def prepare_fc_params(w_torch_layout, b):
    """One-time fc parameter layout conversion (do NOT run per forward call).

    PyTorch nn.Linear stores weight as (num_class, E).  Transpose to (E, N),
    zero-pad N up to one lane-dense multiple of 128 (unmasked stores, no extra
    VMEM/DMA bytes vs. the implicit lane padding), and cast to bf16 so the
    dominant HBM stream is halved and the MXU runs its native input dtype.
    Bias stays f32 and is added on the f32 accumulator.
    """
    num_class, emb = w_torch_layout.shape
    n_pad = _round_up(num_class, _LANE)
    w_t = jnp.transpose(w_torch_layout).astype(jnp.bfloat16)            # (E, N) bf16
    w_p = jnp.zeros((emb, n_pad), jnp.bfloat16).at[:, :num_class].set(w_t)
    b_p = jnp.zeros((1, n_pad), jnp.float32).at[0, :num_class].set(
        b.astype(jnp.float32))
    return w_p, b_p, num_class


@jax.jit
def net_forward_padded(x_nchw, w_p, b_p):
    """Jitted forward.  x_nchw: (B, E, 1, 1); returns lane-dense (B, Np) logits.

    Padded columns [num_class:Np] are exactly zero (zero weight, zero bias);
    downstream consumers (argmax / loss) should mask them or fold the slice in
    rather than paying a standalone slice op.
    """
    B = x_nchw.shape[0]
    E = x_nchw.shape[1]
    Np = w_p.shape[1]

    # torch.flatten(x, start_dim=1) — 1x1 spatial, so a metadata-only reshape.
    feature = x_nchw.reshape(B, E)

    cost = pl.CostEstimate(
        flops=2 * B * E * Np,
        bytes_accessed=B * E * 4 + E * Np * 2 + Np * 4 + B * Np * 4,
        transcendentals=0,
    )

    # Grid-less single-tile call: whole arrays resident in VMEM, no pipeline
    # machinery, no (8,128)-multiple shape requirement (Mosaic pads internally).
    return pl.pallas_call(
        _fc_kernel,
        out_shape=jax.ShapeDtypeStruct((B, Np), jnp.float32),
        in_specs=[
            pl.BlockSpec(memory_space=pltpu.MemorySpace.VMEM),  # activations (B, E) f32
            pl.BlockSpec(memory_space=pltpu.MemorySpace.VMEM),  # weight (E, Np) bf16, resident
            pl.BlockSpec(memory_space=pltpu.MemorySpace.VMEM),  # bias (1, Np) f32
        ],
        out_specs=pl.BlockSpec(memory_space=pltpu.MemorySpace.VMEM),
        cost_estimate=cost,
    )(feature, w_p, b_p)


def net_forward(x_nchw, w_p, b_p, num_class):
    """Exact nn.Module semantics: (B, num_class) logits (consumer-side slice)."""
    return net_forward_padded(x_nchw, w_p, b_p)[:, :num_class]


if __name__ == "__main__":
    # arch == 'resnet18' -> embedding_size = 512
    batch = 2
    embedding_size = 512
    num_class = 10

    key = jax.random.PRNGKey(0)
    kx, kw, kb = jax.random.split(key, 3)

    # Backbone (f1 -> f2) output feature map, NCHW with 1x1 spatial (post avg-pool).
    x = jax.random.normal(kx, (batch, embedding_size, 1, 1), dtype=jnp.float32)

    # Deterministic fc parameters in PyTorch layout: weight (num_class, E), bias (num_class,).
    bound = 1.0 / (embedding_size ** 0.5)
    w_torch_layout = jax.random.uniform(
        kw, (num_class, embedding_size), minval=-bound, maxval=bound,
        dtype=jnp.float32)
    b = jax.random.uniform(
        kb, (num_class,), minval=-bound, maxval=bound, dtype=jnp.float32)

    # One-time layout conversion (transpose + lane padding + bf16) at "load" time.
    w_p, b_p, n_cls = prepare_fc_params(w_torch_layout, b)

    # Run the kernel once; the jitted path emits only the custom call (no pad /
    # slice ops).  The slice to (B, num_class) happens at the consumer.
    logits_padded = net_forward_padded(x, w_p, b_p)
    logits_padded = jax.block_until_ready(logits_padded)
    out = logits_padded[:, :n_cls]

    # Reference check against plain JAX (same math as nn.Linear).  Tolerance is
    # relaxed because the weight/activation stream is bf16 (f32 accumulation).
    ref = x.reshape(batch, embedding_size) @ w_torch_layout.T + b
    assert out.shape == (batch, n_cls)
    assert logits_padded.shape == (batch, _round_up(n_cls, _LANE))
    # Padded columns must be exactly zero (zero weight, zero bias).
    assert jnp.all(logits_padded[:, n_cls:] == 0.0)
    assert jnp.allclose(out, ref, atol=2e-2, rtol=2e-2)

    print("KERNEL_OK")
</pallas_src>

<mosaic_0001>
module attributes {stable_mosaic.version = 11 : i64} {
  func.func @_fc_kernel(%arg0: memref<2x512xf32, #tpu.memory_space<vmem>>, %arg1: memref<512x128xbf16, #tpu.memory_space<vmem>>, %arg2: memref<1x128xf32, #tpu.memory_space<vmem>>, %arg3: memref<2x128xf32, #tpu.memory_space<vmem>>) attributes {dimension_semantics = [], scalar_prefetch = 0 : i64, scratch_operands = 0 : i64, tpu.core_type = #tpu.core_type<tc>} {
    %c0 = arith.constant 0 : index
    %c0_0 = arith.constant 0 : index
    %0 = vector.load %arg0[%c0, %c0_0] : memref<2x512xf32, #tpu.memory_space<vmem>>, vector<2x512xf32>
    %1 = arith.truncf %0 : vector<2x512xf32> to vector<2x512xbf16>
    %c0_1 = arith.constant 0 : index
    %c0_2 = arith.constant 0 : index
    %2 = vector.load %arg1[%c0_1, %c0_2] : memref<512x128xbf16, #tpu.memory_space<vmem>>, vector<512x128xbf16>
    %cst = arith.constant dense<0.000000e+00> : vector<2x128xf32>
    %3 = tpu.matmul %1, %2, %cst {dimension_numbers = #tpu.dot_dimension_numbers<[1], [0], [0], [1], [0, 0, 1, 1], [], []>} : vector<2x512xbf16>, vector<512x128xbf16>, vector<2x128xf32> -> vector<2x128xf32>
    %c0_3 = arith.constant 0 : index
    %c0_4 = arith.constant 0 : index
    %4 = vector.load %arg2[%c0_3, %c0_4] : memref<1x128xf32, #tpu.memory_space<vmem>>, vector<1x128xf32>
    %5 = vector.broadcast %4 : vector<1x128xf32> to vector<2x128xf32>
    %6 = arith.addf %3, %5 : vector<2x128xf32>
    %c0_5 = arith.constant 0 : index
    %c0_6 = arith.constant 0 : index
    %7 = vector.load %arg3[%c0_5, %c0_6] : memref<2x128xf32, #tpu.memory_space<vmem>>, vector<2x128xf32>
    tpu.vector_store %arg3[%c0_5, %c0_6], %6 {strides = array<i32>} : memref<2x128xf32, #tpu.memory_space<vmem>>, vector<2x128xf32>,
    return
  }
}

</mosaic_0001>

<llo_original>
// kernel: net_forward_padded.1
$region0: #{net_forward_padded.1}
  #allocation0 [shape = 'u32[]', space=smem, size = 0x4, offset = 0x4, fixed_abs, tag = 'smem constant byte address 0x4 - core index']
  #allocation1 [shape = 'u32[144,128]{1,0:T(1,128)}', space=vmem, size = 0x12000, scoped, tag = 'internal scratch']
  %s0 = inlined_call_operand.vmem [shape: f32[2,512], index: 0, kind: input, shape index: {}]
  %s1 = inlined_call_operand.hbm [shape: bf16[512,128], index: 1, kind: input, shape index: {}]
  %s2 = inlined_call_operand.vmem [shape: f32[1,128], index: 2, kind: input, shape index: {}]
  %s3 = inlined_call_operand.hbm [shape: f32[2,128], index: 3, kind: output, shape index: {}]
  %s4 = sld [smem:[#allocation0]]
  $region26: #{net_forward_padded.1} parent=0
    _
  %s6 = ssub.s32 1, %s4
  %s7 = scalar_select 0, %s6, %s4
  $region1: #{net_forward_padded.1} parent=0
    #allocation2 [shape = 'u8[131072]{0}', space=vmem, size = 0x20000, scoped, tag = 'input window, operand 1, single buffered']
    #allocation3 [shape = 's32[1]{0}', space=sflag, size = 0x4, scoped, tag = 'scoped memory for net_forward_padded.1']
    #allocation4 [shape = 's32[1]{0}', space=sflag, size = 0x4, scoped, tag = 'scoped memory for net_forward_padded.1']
    #allocation5 [shape = 'u8[1024]{0}', space=vmem, size = 0x400, scoped, tag = 'output window, operand 0, single buffered']
    %8 = vsyncpa [#allocation3], 0
    %9 = vsyncpa [#allocation4], 0
    // Predicated region
    $region2: #{net_forward_padded.1} parent=1 // pred_check
      _
    $region3: #{net_forward_padded.1} parent=1 // pred_check_branch
      %11 = sbr.rel (0) target = $region5
    $region4: #{net_forward_padded.1} parent=1 // pred_region
      _
    $region5: #{net_forward_padded.1} parent=1 // pred_fallthru
      _
    // Predicated region
    $region6: #{net_forward_padded.1} parent=1 // pred_check
      _
    $region7: #{net_forward_padded.1} parent=1 // pred_check_branch
      %13 = sbr.rel (0) target = $region9
    $region8: #{net_forward_padded.1} parent=1 // pred_region
      %s15 = ssub.s32 4096, 4096
      %16 = vsyncadd [#allocation3], %s15
      %s17 = sshll.u32 [#allocation2], 4
      %s18 = int_to_ptr.vmem [resolvable:$true] %s17
      %23 = dma.hbm_to_vmem [thread:$0]  %s1, 4096, %s18, [#allocation3], 64, 64, 4
    $region9: #{net_forward_padded.1} parent=1 // pred_fallthru
      _
    // Predicated region
    $region10: #{net_forward_padded.1} parent=1 // pred_check
      _
    $region11: #{net_forward_padded.1} parent=1 // pred_check_branch
      %25 = sbr.rel (0) target = $region13
    $region12: #{net_forward_padded.1} parent=1 // pred_region
      _
    $region13: #{net_forward_padded.1} parent=1 // pred_fallthru
      _
    // Predicated region
    $region14: #{net_forward_padded.1} parent=1 // pred_check
      _
    $region15: #{net_forward_padded.1} parent=1 // pred_check_branch
      %27 = sbr.rel (0) target = $region17
    $region16: #{net_forward_padded.1} parent=1 // pred_region
      %28 = dma.done [#allocation3], 4096
    $region17: #{net_forward_padded.1} parent=1 // pred_fallthru
      _
    %v30 = vld [vmem:[%s0] sm:$0xff]
    %v32 = vcombine.high %v30, %v30
    %v34 = vunpack.c.l.s4 1983009808
    %v35 = vunpack.c.0.s8 %v34
    %v36 = vlaneseq
    %v37 = vshrl.u32 %v36, 7
    %v38 = vsub.s32 %v35, %v37
    %v39 = vrot.slane %v30, %v38
    %v41 = vunpack.c.l.s4 1983009808
    %v42 = vunpack.c.0.s8 %v41
    %v43 = vlaneseq
    %v44 = vshrl.u32 %v43, 7
    %v45 = vsub.s32 %v42, %v44
    %v46 = vrot.slane %v32, %v45
    %v47 = vcombine.high %v39, %v39
    %v48 = vcombine.high %v46, %v46
    %v53 = vpack.c.bf16 %v39, %v39
    %v54 = vpack.c.bf16 %v47, %v47
    %v55 = vpack.c.bf16 %v46, %v46
    %v56 = vpack.c.bf16 %v48, %v48
    %v57 = vld [vmem:[#allocation2] sm:$0xf]
    %v58 = vld [vmem:[#allocation2 + $0x4] sm:$0xf]
    %v59 = vld [vmem:[#allocation2 + $0x8] sm:$0xf]
    %v60 = vld [vmem:[#allocation2 + $0xc] sm:$0xf]
    %v61 = vld [vmem:[#allocation2 + $0x10] sm:$0xf]
    %v62 = vld [vmem:[#allocation2 + $0x14] sm:$0xf]
    %v63 = vld [vmem:[#allocation2 + $0x18] sm:$0xf]
    %v64 = vld [vmem:[#allocation2 + $0x1c] sm:$0xf]
    %v65 = vld [vmem:[#allocation2 + $0x20] sm:$0xf]
    %v66 = vld [vmem:[#allocation2 + $0x24] sm:$0xf]
    %v67 = vld [vmem:[#allocation2 + $0x28] sm:$0xf]
    %v68 = vld [vmem:[#allocation2 + $0x2c] sm:$0xf]
    %v69 = vld [vmem:[#allocation2 + $0x30] sm:$0xf]
    %v70 = vld [vmem:[#allocation2 + $0x34] sm:$0xf]
    %v71 = vld [vmem:[#allocation2 + $0x38] sm:$0xf]
    %v72 = vld [vmem:[#allocation2 + $0x3c] sm:$0xf]
    %v73 = vld [vmem:[#allocation2 + $0x40] sm:$0xf]
    %v74 = vld [vmem:[#allocation2 + $0x44] sm:$0xf]
    %v75 = vld [vmem:[#allocation2 + $0x48] sm:$0xf]
    %v76 = vld [vmem:[#allocation2 + $0x4c] sm:$0xf]
    %v77 = vld [vmem:[#allocation2 + $0x50] sm:$0xf]
    %v78 = vld [vmem:[#allocation2 + $0x54] sm:$0xf]
    %v79 = vld [vmem:[#allocation2 + $0x58] sm:$0xf]
    %v80 = vld [vmem:[#allocation2 + $0x5c] sm:$0xf]
    %v81 = vld [vmem:[#allocation2 + $0x60] sm:$0xf]
    %v82 = vld [vmem:[#allocation2 + $0x64] sm:$0xf]
    %v83 = vld [vmem:[#allocation2 + $0x68] sm:$0xf]
    %v84 = vld [vmem:[#allocation2 + $0x6c] sm:$0xf]
    %v85 = vld [vmem:[#allocation2 + $0x70] sm:$0xf]
    %v86 = vld [vmem:[#allocation2 + $0x74] sm:$0xf]
    %v87 = vld [vmem:[#allocation2 + $0x78] sm:$0xf]
    %v88 = vld [vmem:[#allocation2 + $0x7c] sm:$0xf]
    %v89 = vld [vmem:[#allocation2 + $0x80] sm:$0xf]
    %v90 = vld [vmem:[#allocation2 + $0x84] sm:$0xf]
    %v91 = vld [vmem:[#allocation2 + $0x88] sm:$0xf]
    %v92 = vld [vmem:[#allocation2 + $0x8c] sm:$0xf]
    %v93 = vld [vmem:[#allocation2 + $0x90] sm:$0xf]
    %v94 = vld [vmem:[#allocation2 + $0x94] sm:$0xf]
    %v95 = vld [vmem:[#allocation2 + $0x98] sm:$0xf]
    %v96 = vld [vmem:[#allocation2 + $0x9c] sm:$0xf]
    %v97 = vld [vmem:[#allocation2 + $0xa0] sm:$0xf]
    %v98 = vld [vmem:[#allocation2 + $0xa4] sm:$0xf]
    %v99 = vld [vmem:[#allocation2 + $0xa8] sm:$0xf]
    %v100 = vld [vmem:[#allocation2 + $0xac] sm:$0xf]
    %v101 = vld [vmem:[#allocation2 + $0xb0] sm:$0xf]
    %v102 = vld [vmem:[#allocation2 + $0xb4] sm:$0xf]
    %v103 = vld [vmem:[#allocation2 + $0xb8] sm:$0xf]
    %v104 = vld [vmem:[#allocation2 + $0xbc] sm:$0xf]
    %v105 = vld [vmem:[#allocation2 + $0xc0] sm:$0xf]
    %v106 = vld [vmem:[#allocation2 + $0xc4] sm:$0xf]
    %v107 = vld [vmem:[#allocation2 + $0xc8] sm:$0xf]
    %v108 = vld [vmem:[#allocation2 + $0xcc] sm:$0xf]
    %v109 = vld [vmem:[#allocation2 + $0xd0] sm:$0xf]
    %v110 = vld [vmem:[#allocation2 + $0xd4] sm:$0xf]
    %v111 = vld [vmem:[#allocation2 + $0xd8] sm:$0xf]
    %v112 = vld [vmem:[#allocation2 + $0xdc] sm:$0xf]
    %v113 = vld [vmem:[#allocation2 + $0xe0] sm:$0xf]
    %v114 = vld [vmem:[#allocation2 + $0xe4] sm:$0xf]
    %v115 = vld [vmem:[#allocation2 + $0xe8] sm:$0xf]
    %v116 = vld [vmem:[#allocation2 + $0xec] sm:$0xf]
    %v117 = vld [vmem:[#allocation2 + $0xf0] sm:$0xf]
    %v118 = vld [vmem:[#allocation2 + $0xf4] sm:$0xf]
    %v119 = vld [vmem:[#allocation2 + $0xf8] sm:$0xf]
    %v120 = vld [vmem:[#allocation2 + $0xfc] sm:$0xf]
    %v121 = vld [vmem:[%s2] sm:$0x1]
    %v123 = vlaneseq
    %v124 = vshrl.u32 %v123, 7
    %v125 = vsub.s32 0, %v124
    %v126 = vrot.slane %v121, %v125
    %v192 = vunpack.c.l.b16 %v57
    %v193 = vunpack.c.l.b16 %v58
    %v194 = vunpack.c.l.b16 %v59
    %v195 = vunpack.c.l.b16 %v60
    %v196 = vunpack.c.l.b16 %v61
    %v197 = vunpack.c.l.b16 %v62
    %v198 = vunpack.c.l.b16 %v63
    %v199 = vunpack.c.l.b16 %v64
    %v200 = vunpack.c.l.b16 %v65
    %v201 = vunpack.c.l.b16 %v66
    %v202 = vunpack.c.l.b16 %v67
    %v203 = vunpack.c.l.b16 %v68
    %v204 = vunpack.c.l.b16 %v69
    %v205 = vunpack.c.l.b16 %v70
    %v206 = vunpack.c.l.b16 %v71
    %v207 = vunpack.c.l.b16 %v72
    %v208 = vunpack.c.l.b16 %v73
    %v209 = vunpack.c.l.b16 %v74
    %v210 = vunpack.c.l.b16 %v75
    %v211 = vunpack.c.l.b16 %v76
    %v212 = vunpack.c.l.b16 %v77
    %v213 = vunpack.c.l.b16 %v78
    %v214 = vunpack.c.l.b16 %v79
    %v215 = vunpack.c.l.b16 %v80
    %v216 = vunpack.c.l.b16 %v81
    %v217 = vunpack.c.l.b16 %v82
    %v218 = vunpack.c.l.b16 %v83
    %v219 = vunpack.c.l.b16 %v84
    %v220 = vunpack.c.l.b16 %v85
    %v221 = vunpack.c.l.b16 %v86
    %v222 = vunpack.c.l.b16 %v87
    %v223 = vunpack.c.l.b16 %v88
    %v224 = vunpack.c.l.b16 %v89
    %v225 = vunpack.c.l.b16 %v90
    %v226 = vunpack.c.l.b16 %v91
    %v227 = vunpack.c.l.b16 %v92
    %v228 = vunpack.c.l.b16 %v93
    %v229 = vunpack.c.l.b16 %v94
    %v230 = vunpack.c.l.b16 %v95
    %v231 = vunpack.c.l.b16 %v96
    %v232 = vunpack.c.l.b16 %v97
    %v233 = vunpack.c.l.b16 %v98
    %v234 = vunpack.c.l.b16 %v99
    %v235 = vunpack.c.l.b16 %v100
    %v236 = vunpack.c.l.b16 %v101
    %v237 = vunpack.c.l.b16 %v102
    %v238 = vunpack.c.l.b16 %v103
    %v239 = vunpack.c.l.b16 %v104
    %v240 = vunpack.c.l.b16 %v105
    %v241 = vunpack.c.l.b16 %v106
    %v242 = vunpack.c.l.b16 %v107
    %v243 = vunpack.c.l.b16 %v108
    %v244 = vunpack.c.l.b16 %v109
    %v245 = vunpack.c.l.b16 %v110
    %v246 = vunpack.c.l.b16 %v111
    %v247 = vunpack.c.l.b16 %v112
    %v248 = vunpack.c.l.b16 %v113
    %v249 = vunpack.c.l.b16 %v114
    %v250 = vunpack.c.l.b16 %v115
    %v251 = vunpack.c.l.b16 %v116
    %v252 = vunpack.c.l.b16 %v117
    %v253 = vunpack.c.l.b16 %v118
    %v254 = vunpack.c.l.b16 %v119
    %v255 = vunpack.c.l.b16 %v120
    %v256 = vpack.c.b16 %v193, %v192
    %v257 = vpack.c.b16 %v195, %v194
    %v258 = vpack.c.b16 %v197, %v196
    %v259 = vpack.c.b16 %v199, %v198
    %v260 = vpack.c.b16 %v201, %v200
    %v261 = vpack.c.b16 %v203, %v202
    %v262 = vpack.c.b16 %v205, %v204
    %v263 = vpack.c.b16 %v207, %v206
    %v264 = vpack.c.b16 %v209, %v208
    %v265 = vpack.c.b16 %v211, %v210
    %v266 = vpack.c.b16 %v213, %v212
    %v267 = vpack.c.b16 %v215, %v214
    %v268 = vpack.c.b16 %v217, %v216
    %v269 = vpack.c.b16 %v219, %v218
    %v270 = vpack.c.b16 %v221, %v220
    %v271 = vpack.c.b16 %v223, %v222
    %v272 = vpack.c.b16 %v225, %v224
    %v273 = vpack.c.b16 %v227, %v226
    %v274 = vpack.c.b16 %v229, %v228
    %v275 = vpack.c.b16 %v231, %v230
    %v276 = vpack.c.b16 %v233, %v232
    %v277 = vpack.c.b16 %v235, %v234
    %v278 = vpack.c.b16 %v237, %v236
    %v279 = vpack.c.b16 %v239, %v238
    %v280 = vpack.c.b16 %v241, %v240
    %v281 = vpack.c.b16 %v243, %v242
    %v282 = vpack.c.b16 %v245, %v244
    %v283 = vpack.c.b16 %v247, %v246
    %v284 = vpack.c.b16 %v249, %v248
    %v285 = vpack.c.b16 %v251, %v250
    %v286 = vpack.c.b16 %v253, %v252
    %v287 = vpack.c.b16 %v255, %v254
    %320 = vmatprep.subr.bf16.mxu0 0
    %321 = vmatpush1.bf16.msra.mxu0 %v256
    %322 = vmatprep.subr.bf16.mxu0 0
    %323 = vmatpush1.bf16.msra.mxu0 %v257
    %324 = vmatprep.subr.bf16.mxu0 0
    %325 = vmatpush1.bf16.msra.mxu0 %v258
    %326 = vmatprep.subr.bf16.mxu0 0
    %327 = vmatpush1.bf16.msra.mxu0 %v259
    %328 = vmatprep.subr.bf16.mxu0 0
    %329 = vmatpush1.bf16.msra.mxu0 %v260
    %330 = vmatprep.subr.bf16.mxu0 0
    %331 = vmatpush1.bf16.msra.mxu0 %v261
    %332 = vmatprep.subr.bf16.mxu0 0
    %333 = vmatpush1.bf16.msra.mxu0 %v262
    %334 = vmatprep.subr.bf16.mxu0 0
    %335 = vmatpush1.bf16.msra.mxu0 %v263
    %336 = vmatprep.subr.bf16.mxu0 0
    %337 = vmatpush1.bf16.msra.mxu0 %v264
    %338 = vmatprep.subr.bf16.mxu0 0
    %339 = vmatpush1.bf16.msra.mxu0 %v265
    %340 = vmatprep.subr.bf16.mxu0 0
    %341 = vmatpush1.bf16.msra.mxu0 %v266
    %342 = vmatprep.subr.bf16.mxu0 0
    %343 = vmatpush1.bf16.msra.mxu0 %v267
    %344 = vmatprep.subr.bf16.mxu0 0
    %345 = vmatpush1.bf16.msra.mxu0 %v268
    %346 = vmatprep.subr.bf16.mxu0 0
    %347 = vmatpush1.bf16.msra.mxu0 %v269
    %348 = vmatprep.subr.bf16.mxu0 0
    %349 = vmatpush1.bf16.msra.mxu0 %v270
    %350 = vmatprep.subr.bf16.mxu0 0
    %351 = vmatpush1.bf16.msra.mxu0 %v271
    %352 = vmatprep.mubr.bf16.mxu0 %v54
    %353 = vmatmul.mubr.bf16.gmra.mrb[0].mxu0 %v53
    %v354 = vpop.f32.mrb[0].mxu0
    %v355 = vadd.f32 %v126, %v354
    %v356 = vpop.f32.mrb[0].mxu0
    %v357 = vpop.f32.mrb[0].mxu0
    %v358 = vpop.f32.mrb[0].mxu0
    %359 = vdwg.mxu0
    %360 = vmatprep.subr.bf16.mxu0 0
    %361 = vmatpush1.bf16.msra.mxu0 %v272
    %362 = vmatprep.subr.bf16.mxu0 0
    %363 = vmatpush1.bf16.msra.mxu0 %v273
    %364 = vmatprep.subr.bf16.mxu0 0
    %365 = vmatpush1.bf16.msra.mxu0 %v274
    %366 = vmatprep.subr.bf16.mxu0 0
    %367 = vmatpush1.bf16.msra.mxu0 %v275
    %368 = vmatprep.subr.bf16.mxu0 0
    %369 = vmatpush1.bf16.msra.mxu0 %v276
    %370 = vmatprep.subr.bf16.mxu0 0
    %371 = vmatpush1.bf16.msra.mxu0 %v277
    %372 = vmatprep.subr.bf16.mxu0 0
    %373 = vmatpush1.bf16.msra.mxu0 %v278
    %374 = vmatprep.subr.bf16.mxu0 0
    %375 = vmatpush1.bf16.msra.mxu0 %v279
    %376 = vmatprep.subr.bf16.mxu0 0
    %377 = vmatpush1.bf16.msra.mxu0 %v280
    %378 = vmatprep.subr.bf16.mxu0 0
    %379 = vmatpush1.bf16.msra.mxu0 %v281
    %380 = vmatprep.subr.bf16.mxu0 0
    %381 = vmatpush1.bf16.msra.mxu0 %v282
    %382 = vmatprep.subr.bf16.mxu0 0
    %383 = vmatpush1.bf16.msra.mxu0 %v283
    %384 = vmatprep.subr.bf16.mxu0 0
    %385 = vmatpush1.bf16.msra.mxu0 %v284
    %386 = vmatprep.subr.bf16.mxu0 0
    %387 = vmatpush1.bf16.msra.mxu0 %v285
    %388 = vmatprep.subr.bf16.mxu0 0
    %389 = vmatpush1.bf16.msra.mxu0 %v286
    %390 = vmatprep.subr.bf16.mxu0 0
    %391 = vmatpush1.bf16.msra.mxu0 %v287
    %392 = vmatprep.mubr.bf16.mxu0 %v56
    %393 = vmatmul.mubr.bf16.gmra.mrb[0].mxu0 %v55
    %v394 = vpop.f32.mrb[0].mxu0
    %v395 = vadd.f32 %v355, %v394
    %v396 = vpop.f32.mrb[0].mxu0
    %v397 = vpop.f32.mrb[0].mxu0
    %v398 = vpop.f32.mrb[0].mxu0
    %399 = vdwg.mxu0
    %400 = vst [vmem:[#allocation5] sm:$0x3] %v395
    // Predicated region
    $region18: #{net_forward_padded.1} parent=1 // pred_check
      _
    $region19: #{net_forward_padded.1} parent=1 // pred_check_branch
      %402 = sbr.rel (0) target = $region21
    $region20: #{net_forward_padded.1} parent=1 // pred_region
      %s404 = ssub.s32 32, 32
      %405 = vsyncadd [#allocation4], %s404
      %s407 = sshll.u32 [#allocation5], 4
      %s408 = int_to_ptr.vmem [resolvable:$true] %s407
      %410 = dma.vmem_to_hbm [thread:$0]  %s408, 32, %s3, [#allocation4]
    $region21: #{net_forward_padded.1} parent=1 // pred_fallthru
      _
    // Predicated region
    $region22: #{net_forward_padded.1} parent=1 // pred_check
      _
    $region23: #{net_forward_padded.1} parent=1 // pred_check_branch
      %412 = sbr.rel (0) target = $region25
    $region24: #{net_forward_padded.1} parent=1 // pred_region
      %413 = dma.done [#allocation4], 32
    $region25: #{net_forward_padded.1} parent=1 // pred_fallthru
      _
    %414 = vsyncpa [#allocation3], 1
    %415 = vsyncpa [#allocation4], 1

</llo_original>
